<compile_context>
chip_gen: v7x
topology: tpu7x:2x2x1
jax: 0.10.0
libtpu: 0.0.40
codegen_flags: <defaults>
</compile_context>

<pallas_src>
import functools

import jax
import jax.numpy as jnp
from jax.experimental import pallas as pl
from jax.experimental.pallas import tpu as pltpu

BN_EPS = 1e-3  # BatchNorm1d(..., eps=0.001)


def _round_up(n, m):
    return ((n + m - 1) // m) * m


def _encoder_h_kernel(x_ref, w1x_ref, gamma_ref, beta_ref, bh_ref,
                      catb_hbm, wh_hbm, out_ref,
                      acc_ref, catb_v, wh_v, sem, *, o_pad, batch):
    k = pl.program_id(0)

    def invariant_dmas():
        return (pltpu.make_async_copy(catb_hbm, catb_v, sem.at[0]),
                pltpu.make_async_copy(wh_hbm, wh_v, sem.at[1]))

    @pl.when(k == 0)
    def _():  # kick off the epilogue-only operand fetches; hidden behind the K loop
        for cp in invariant_dmas():
            cp.start()

    # x @ W1_x tile (bf16 in, f32 accumulate); K tiled over the grid.
    part = jnp.dot(x_ref[...], w1x_ref[...], preferred_element_type=jnp.float32)

    @pl.when(k == 0)
    def _():  # fold zero-init into the first store (saves a full acc write pass)
        acc_ref[...] = part

    @pl.when(k > 0)
    def _():
        acc_ref[...] += part

    @pl.when(k == pl.num_programs(0) - 1)
    def _():
        for cp in invariant_dmas():
            cp.wait()

        # Linear bias + categorical one-hot contribution (precomputed gather).
        a = acc_ref[...] + catb_v[...]

        # BatchNorm1d: training-mode batch stats, biased variance, two-pass
        # (subtract mean before squaring) for numerical stability.  Valid only
        # because the batch dimension is never tiled.
        inv_b = 1.0 / batch
        mean = jnp.sum(a, axis=0, keepdims=True) * inv_b
        c = a - mean
        var = jnp.sum(c * c, axis=0, keepdims=True) * inv_b
        z = jnp.maximum(
            c * jax.lax.rsqrt(var + BN_EPS) * gamma_ref[...] + beta_ref[...], 0.0)
        # TODO(synk): nn.Dropout(p=dropout_rate) is stochastic; eval-mode identity here.

        # Fused heads [mu | sigma | h], each padded to its own 128-lane slab:
        # one MXU pass, unmasked lane-dense stores per slab.
        heads = (jnp.dot(z.astype(jnp.bfloat16), wh_v[...],
                         preferred_element_type=jnp.float32) + bh_ref[...])
        out_ref[:, :o_pad] = heads[:, :o_pad]                       # mu
        s = jnp.maximum(heads[:, o_pad:2 * o_pad], -50.0)           # clamp(min=-50)
        out_ref[:, o_pad:2 * o_pad] = 0.5 * jnp.tanh(0.5 * s) + 0.5  # sigmoid (1 EUP op)
        out_ref[:, 2 * o_pad:] = heads[:, 2 * o_pad:]               # h


def encoder_h_forward(x, cat, params, n_cat):
    """x: [B, n_in] float32, cat: [B] int32 category ids in [0, n_cat)."""
    del n_cat  # one-hot handled as a row gather of w1's categorical rows
    B, n_in = x.shape
    n_hidden = params["w1"].shape[1]
    n_out = params["w_mu"].shape[1]

    H_pad = _round_up(n_hidden, 128)
    O_pad = _round_up(n_out, 128)            # per-head lane-aligned slab
    N_pad = 3 * O_pad                        # [mu_pad | sigma_pad | h_pad]
    K_pad128 = _round_up(n_in, 128)

    # ---- VMEM budgeting: pick the largest K tile that fits a v7x-safe budget ----
    # Single-buffered scratch (acc, cat_bias, fused head W) + conservative 2x for the
    # auto-pipelined output and the tiny invariant inputs.
    fixed_bytes = (2 * B * H_pad * 4            # acc + cat_bias scratch (f32)
                   + H_pad * N_pad * 2          # fused head weights scratch (bf16)
                   + 2 * B * N_pad * 4          # output block (counted double-buffered)
                   + 2 * (2 * H_pad + N_pad) * 4)  # gamma/beta/b_heads (2x, negligible)
    per_tk_bytes = 2 * (B + H_pad) * 2          # double-buffered bf16 x / w1 tiles per K
    budget = 44 * 1024 * 1024                   # working target; v7x has 64 MiB physical
    tk_fit = max((budget - fixed_bytes) // per_tk_bytes, 128)
    TK = min(K_pad128, 1024, (tk_fit // 128) * 128)
    K_pad = _round_up(n_in, TK)

    needed = fixed_bytes + per_tk_bytes * TK
    vmem_limit = min(max(needed + needed // 4 + (2 << 20), 32 << 20), 48 << 20)
    # TODO(synk): shapes whose (B, H_pad) accumulator + weights exceed ~48 MiB need a
    # B-tiled two-pass restructure to fit v7x's 64 MiB VMEM; allow the limit to grow
    # here so v5e/v6e (128 MiB) still compile.
    vmem_limit = max(vmem_limit, needed + (2 << 20))

    # ---- operand prep (pad / fuse / dtype); negligible vs the matmuls ----
    x_p = jnp.pad(x, ((0, 0), (0, K_pad - n_in))).astype(jnp.bfloat16)
    w1x = jnp.pad(params["w1"][:n_in],
                  ((0, K_pad - n_in), (0, H_pad - n_hidden))).astype(jnp.bfloat16)

    # Categorical one-hot @ W1_cat == row gather of w1's cat rows; fold in b1 (f32).
    cat_bias = params["w1"][n_in:][cat.astype(jnp.int32)] + params["b1"]
    cat_bias = jnp.pad(cat_bias, ((0, 0), (0, H_pad - n_hidden)))

    gamma = jnp.pad(params["gamma"], ((0, 0), (0, H_pad - n_hidden)),
                    constant_values=1.0)
    beta = jnp.pad(params["beta"], ((0, 0), (0, H_pad - n_hidden)))

    def pad_w(w):  # [n_hidden, n_out] -> [H_pad, O_pad]
        return jnp.pad(w, ((0, H_pad - n_hidden), (0, O_pad - n_out)))

    def pad_b(b):  # [1, n_out] -> [1, O_pad]
        return jnp.pad(b, ((0, 0), (0, O_pad - n_out)))

    w_heads = jnp.concatenate(
        [pad_w(params["w_mu"]), pad_w(params["w_sigma"]), pad_w(params["w_h"])],
        axis=1).astype(jnp.bfloat16)
    b_heads = jnp.concatenate(
        [pad_b(params["b_mu"]), pad_b(params["b_sigma"]), pad_b(params["b_h"])],
        axis=1)

    kernel = functools.partial(_encoder_h_kernel, o_pad=O_pad, batch=B)

    flops = 2 * B * (K_pad * H_pad + H_pad * N_pad)
    bytes_accessed = int(B * K_pad * 2 + K_pad * H_pad * 2 + B * H_pad * 4
                         + 2 * H_pad * 4 + H_pad * N_pad * 2 + N_pad * 4
                         + B * N_pad * 4)

    out = pl.pallas_call(
        kernel,
        out_shape=jax.ShapeDtypeStruct((B, N_pad), jnp.float32),
        grid_spec=pltpu.PrefetchScalarGridSpec(
            num_scalar_prefetch=0,
            grid=(K_pad // TK,),
            in_specs=[
                pl.BlockSpec((B, TK), lambda k: (0, k)),          # x K-tile
                pl.BlockSpec((TK, H_pad), lambda k: (k, 0)),      # w1_x K-tile
                pl.BlockSpec((1, H_pad), lambda k: (0, 0)),       # gamma (tiny)
                pl.BlockSpec((1, H_pad), lambda k: (0, 0)),       # beta (tiny)
                pl.BlockSpec((1, N_pad), lambda k: (0, 0)),       # fused head bias (tiny)
                pl.BlockSpec(memory_space=pl.ANY),                # cat_bias (manual DMA)
                pl.BlockSpec(memory_space=pl.ANY),                # fused head W (manual DMA)
            ],
            out_specs=pl.BlockSpec((B, N_pad), lambda k: (0, 0)),
            scratch_shapes=[
                pltpu.VMEM((B, H_pad), jnp.float32),              # f32 accumulator
                pltpu.VMEM((B, H_pad), jnp.float32),              # cat_bias (single buf)
                pltpu.VMEM((H_pad, N_pad), jnp.bfloat16),         # head W (single buf)
                pltpu.SemaphoreType.DMA((2,)),
            ],
        ),
        compiler_params=pltpu.CompilerParams(
            dimension_semantics=("arbitrary",),       # K is a sequential reduction
            vmem_limit_bytes=int(vmem_limit),
        ),
        cost_estimate=pl.CostEstimate(flops=flops, transcendentals=B * O_pad,
                                      bytes_accessed=bytes_accessed),
    )(x_p, w1x, gamma, beta, b_heads, cat_bias, w_heads)

    mu = out[:, :n_out]
    sigma = out[:, O_pad:O_pad + n_out]
    h = out[:, 2 * O_pad:2 * O_pad + n_out]
    return mu, sigma, h


def encoder_h_reference(x, cat, params, n_cat):
    """Pure-JAX reference mirroring the kernel's numerics (bf16 matmuls)."""
    n_in = x.shape[1]
    w1x = params["w1"][:n_in].astype(jnp.bfloat16)
    w1c = params["w1"][n_in:]
    a = (jnp.dot(x.astype(jnp.bfloat16), w1x, preferred_element_type=jnp.float32)
         + jnp.dot(jax.nn.one_hot(cat, n_cat, dtype=jnp.float32), w1c)
         + params["b1"])
    mean = jnp.mean(a, axis=0, keepdims=True)
    var = jnp.mean((a - mean) ** 2, axis=0, keepdims=True)
    a = (a - mean) * jax.lax.rsqrt(var + BN_EPS) * params["gamma"] + params["beta"]
    z = jnp.maximum(a, 0.0).astype(jnp.bfloat16)
    mu = jnp.dot(z, params["w_mu"].astype(jnp.bfloat16),
                 preferred_element_type=jnp.float32) + params["b_mu"]
    s = jnp.dot(z, params["w_sigma"].astype(jnp.bfloat16),
                preferred_element_type=jnp.float32) + params["b_sigma"]
    sigma = jax.nn.sigmoid(jnp.maximum(s, -50.0))
    h = jnp.dot(z, params["w_h"].astype(jnp.bfloat16),
                preferred_element_type=jnp.float32) + params["b_h"]
    return mu, sigma, h


def init_params(key, n_in, n_out, n_cat, n_hidden):
    """Deterministic synthetic parameters matching the module's shapes."""
    d_in = n_in + n_cat
    ks = jax.random.split(key, 4)

    def linear(k, fan_in, fan_out):
        # PyTorch nn.Linear default init: U(-1/sqrt(fan_in), 1/sqrt(fan_in)).
        bound = 1.0 / float(fan_in) ** 0.5
        kw, kb = jax.random.split(k)
        w = jax.random.uniform(kw, (fan_in, fan_out), jnp.float32, -bound, bound)
        b = jax.random.uniform(kb, (1, fan_out), jnp.float32, -bound, bound)
        return w, b

    w1, b1 = linear(ks[0], d_in, n_hidden)
    gamma = jnp.ones((1, n_hidden), jnp.float32)   # BatchNorm1d weight
    beta = jnp.zeros((1, n_hidden), jnp.float32)   # BatchNorm1d bias
    w_mu, b_mu = linear(ks[1], n_hidden, n_out)
    # sigma head: EncoderH.init_weights(self.sigma, bias_val=1.5)
    w_sigma = 1e-8 * jax.random.normal(ks[2], (n_hidden, n_out), jnp.float32)
    b_sigma = jnp.full((1, n_out), 1.5, jnp.float32)
    w_h, b_h = linear(ks[3], n_hidden, n_out)

    return dict(w1=w1, b1=b1, gamma=gamma, beta=beta,
                w_mu=w_mu, b_mu=b_mu,
                w_sigma=w_sigma, b_sigma=b_sigma,
                w_h=w_h, b_h=b_h)


if __name__ == "__main__":
    B, N_IN, N_HIDDEN, N_OUT, N_CAT = 8, 32, 32, 16, 3

    key = jax.random.PRNGKey(0)
    k_x, k_cat, k_p = jax.random.split(key, 3)

    x = jax.random.normal(k_x, (B, N_IN), jnp.float32)
    cat = jax.random.randint(k_cat, (B,), 0, N_CAT, jnp.int32)
    params = init_params(k_p, N_IN, N_OUT, N_CAT, N_HIDDEN)

    mu, sigma, h = encoder_h_forward(x, cat, params, N_CAT)
    jax.block_until_ready((mu, sigma, h))

    mu_r, sigma_r, h_r = encoder_h_reference(x, cat, params, N_CAT)

    assert mu.shape == (B, N_OUT) and sigma.shape == (B, N_OUT) and h.shape == (B, N_OUT)
    assert bool(jnp.all((sigma > 0.0) & (sigma < 1.0)))
    for got, want in ((mu, mu_r), (sigma, sigma_r), (h, h_r)):
        err = float(jnp.max(jnp.abs(got - want)))
        assert err < 2e-2, err

    print("KERNEL_OK")
</pallas_src>

<mosaic_0001>
module attributes {stable_mosaic.version = 11 : i64} {
  func.func @_encoder_h_kernel(%arg0: i32, %arg1: memref<8x128xbf16, #tpu.memory_space<vmem>>, %arg2: memref<128x128xbf16, #tpu.memory_space<vmem>>, %arg3: memref<1x128xf32, #tpu.memory_space<vmem>>, %arg4: memref<1x128xf32, #tpu.memory_space<vmem>>, %arg5: memref<1x384xf32, #tpu.memory_space<vmem>>, %arg6: memref<8x128xf32, #tpu.memory_space<any>>, %arg7: memref<128x384xbf16, #tpu.memory_space<any>>, %arg8: memref<8x384xf32, #tpu.memory_space<vmem>>, %arg9: memref<8x128xf32, #tpu.memory_space<vmem>>, %arg10: memref<8x128xf32, #tpu.memory_space<vmem>>, %arg11: memref<128x384xbf16, #tpu.memory_space<vmem>>, %arg12: memref<2x!tpu.dma_semaphore, #tpu.memory_space<semaphore_mem>>) attributes {dimension_semantics = [#tpu.dimension_semantics<arbitrary>], iteration_bounds = array<i64: 1>, scalar_prefetch = 0 : i64, scratch_operands = 4 : i64, tpu.core_type = #tpu.core_type<tc>, window_params = [{transform_indices = @transform_0, window_bounds = array<i64: 8, 128>}, {transform_indices = @transform_1, window_bounds = array<i64: 128, 128>}, {pipeline_mode = #tpu.pipeline_mode<synchronous>, transform_indices = @transform_2, window_bounds = array<i64: 1, 128>}, {pipeline_mode = #tpu.pipeline_mode<synchronous>, transform_indices = @transform_3, window_bounds = array<i64: 1, 128>}, {pipeline_mode = #tpu.pipeline_mode<synchronous>, transform_indices = @transform_4, window_bounds = array<i64: 1, 384>}, {}, {}, {pipeline_mode = #tpu.pipeline_mode<synchronous>, transform_indices = @transform_7, window_bounds = array<i64: 8, 384>}]} {
    %c0_i32 = arith.constant 0 : i32
    %0 = arith.cmpi eq, %arg0, %c0_i32 : i32
    %1 = arith.extui %0 : i1 to i32
    %c0_i32_0 = arith.constant 0 : i32
    %2 = arith.cmpi ne, %1, %c0_i32_0 : i32
    scf.if %2 {
      %c0_i32_10 = arith.constant 0 : i32
      %15 = tpu.memref_slice %arg12[%c0_i32_10] : memref<2x!tpu.dma_semaphore, #tpu.memory_space<semaphore_mem>> -> memref<1x!tpu.dma_semaphore, #tpu.memory_space<semaphore_mem>>
      %16 = tpu.memref_squeeze %15 : memref<1x!tpu.dma_semaphore, #tpu.memory_space<semaphore_mem>> -> memref<!tpu.dma_semaphore, #tpu.memory_space<semaphore_mem>>
      tpu.enqueue_dma source(%arg6 : memref<8x128xf32, #tpu.memory_space<any>>) target(%arg10 : memref<8x128xf32, #tpu.memory_space<vmem>>) target_semaphore(%16 : memref<!tpu.dma_semaphore, #tpu.memory_space<semaphore_mem>>)
      %c1_i32 = arith.constant 1 : i32
      %17 = tpu.memref_slice %arg12[%c1_i32] : memref<2x!tpu.dma_semaphore, #tpu.memory_space<semaphore_mem>> -> memref<1x!tpu.dma_semaphore, #tpu.memory_space<semaphore_mem>>
      %18 = tpu.memref_squeeze %17 : memref<1x!tpu.dma_semaphore, #tpu.memory_space<semaphore_mem>> -> memref<!tpu.dma_semaphore, #tpu.memory_space<semaphore_mem>>
      tpu.enqueue_dma source(%arg7 : memref<128x384xbf16, #tpu.memory_space<any>>) target(%arg11 : memref<128x384xbf16, #tpu.memory_space<vmem>>) target_semaphore(%18 : memref<!tpu.dma_semaphore, #tpu.memory_space<semaphore_mem>>)
    } else {
    }
    %c0 = arith.constant 0 : index
    %c0_1 = arith.constant 0 : index
    %3 = vector.load %arg1[%c0, %c0_1] : memref<8x128xbf16, #tpu.memory_space<vmem>>, vector<8x128xbf16>
    %c0_2 = arith.constant 0 : index
    %c0_3 = arith.constant 0 : index
    %4 = vector.load %arg2[%c0_2, %c0_3] : memref<128x128xbf16, #tpu.memory_space<vmem>>, vector<128x128xbf16>
    %cst = arith.constant dense<0.000000e+00> : vector<8x128xf32>
    %5 = tpu.matmul %3, %4, %cst {dimension_numbers = #tpu.dot_dimension_numbers<[1], [0], [0], [1], [0, 0, 1, 1], [], []>} : vector<8x128xbf16>, vector<128x128xbf16>, vector<8x128xf32> -> vector<8x128xf32>
    %c0_i32_4 = arith.constant 0 : i32
    %6 = arith.cmpi eq, %arg0, %c0_i32_4 : i32
    %7 = arith.extui %6 : i1 to i32
    %c0_i32_5 = arith.constant 0 : i32
    %8 = arith.cmpi ne, %7, %c0_i32_5 : i32
    scf.if %8 {
      %c0_10 = arith.constant 0 : index
      %c0_11 = arith.constant 0 : index
      %15 = vector.load %arg9[%c0_10, %c0_11] : memref<8x128xf32, #tpu.memory_space<vmem>>, vector<8x128xf32>
      tpu.vector_store %arg9[%c0_10, %c0_11], %5 {strides = array<i32>} : memref<8x128xf32, #tpu.memory_space<vmem>>, vector<8x128xf32>,
    } else {
    }
    %c0_i32_6 = arith.constant 0 : i32
    %9 = arith.cmpi sgt, %arg0, %c0_i32_6 : i32
    %10 = arith.extui %9 : i1 to i32
    %c0_i32_7 = arith.constant 0 : i32
    %11 = arith.cmpi ne, %10, %c0_i32_7 : i32
    scf.if %11 {
      %c0_10 = arith.constant 0 : index
      %c0_11 = arith.constant 0 : index
      %15 = vector.load %arg9[%c0_10, %c0_11] : memref<8x128xf32, #tpu.memory_space<vmem>>, vector<8x128xf32>
      %16 = arith.addf %15, %5 : vector<8x128xf32>
      %c0_12 = arith.constant 0 : index
      %c0_13 = arith.constant 0 : index
      %17 = vector.load %arg9[%c0_12, %c0_13] : memref<8x128xf32, #tpu.memory_space<vmem>>, vector<8x128xf32>
      tpu.vector_store %arg9[%c0_12, %c0_13], %16 {strides = array<i32>} : memref<8x128xf32, #tpu.memory_space<vmem>>, vector<8x128xf32>,
    } else {
    }
    %c0_i32_8 = arith.constant 0 : i32
    %12 = arith.cmpi eq, %arg0, %c0_i32_8 : i32
    %13 = arith.extui %12 : i1 to i32
    %c0_i32_9 = arith.constant 0 : i32
    %14 = arith.cmpi ne, %13, %c0_i32_9 : i32
    scf.if %14 {
      %c0_i32_10 = arith.constant 0 : i32
      %15 = tpu.memref_slice %arg12[%c0_i32_10] : memref<2x!tpu.dma_semaphore, #tpu.memory_space<semaphore_mem>> -> memref<1x!tpu.dma_semaphore, #tpu.memory_space<semaphore_mem>>
      %16 = tpu.memref_squeeze %15 : memref<1x!tpu.dma_semaphore, #tpu.memory_space<semaphore_mem>> -> memref<!tpu.dma_semaphore, #tpu.memory_space<semaphore_mem>>
      tpu.wait_dma2 semaphore(%16 : memref<!tpu.dma_semaphore, #tpu.memory_space<semaphore_mem>>) src(%arg6 : memref<8x128xf32, #tpu.memory_space<any>>) dst(%arg10 : memref<8x128xf32, #tpu.memory_space<vmem>>)
      %c1_i32 = arith.constant 1 : i32
      %17 = tpu.memref_slice %arg12[%c1_i32] : memref<2x!tpu.dma_semaphore, #tpu.memory_space<semaphore_mem>> -> memref<1x!tpu.dma_semaphore, #tpu.memory_space<semaphore_mem>>
      %18 = tpu.memref_squeeze %17 : memref<1x!tpu.dma_semaphore, #tpu.memory_space<semaphore_mem>> -> memref<!tpu.dma_semaphore, #tpu.memory_space<semaphore_mem>>
      tpu.wait_dma2 semaphore(%18 : memref<!tpu.dma_semaphore, #tpu.memory_space<semaphore_mem>>) src(%arg7 : memref<128x384xbf16, #tpu.memory_space<any>>) dst(%arg11 : memref<128x384xbf16, #tpu.memory_space<vmem>>)
      %c0_11 = arith.constant 0 : index
      %c0_12 = arith.constant 0 : index
      %19 = vector.load %arg9[%c0_11, %c0_12] : memref<8x128xf32, #tpu.memory_space<vmem>>, vector<8x128xf32>
      %c0_13 = arith.constant 0 : index
      %c0_14 = arith.constant 0 : index
      %20 = vector.load %arg10[%c0_13, %c0_14] : memref<8x128xf32, #tpu.memory_space<vmem>>, vector<8x128xf32>
      %21 = arith.addf %19, %20 : vector<8x128xf32>
      %cst_15 = arith.constant dense<0.000000e+00> : vector<128xf32>
      %22 = vector.multi_reduction <add>, %21, %cst_15 [0] : vector<8x128xf32> to vector<128xf32>
      %23 = vector.shape_cast %22 : vector<128xf32> to vector<1x128xf32>
      %cst_16 = arith.constant 1.250000e-01 : f32
      %24 = vector.broadcast %cst_16 : f32 to vector<1x128xf32>
      %25 = arith.mulf %23, %24 : vector<1x128xf32>
      %26 = vector.broadcast %25 : vector<1x128xf32> to vector<8x128xf32>
      %27 = arith.subf %21, %26 : vector<8x128xf32>
      %28 = arith.mulf %27, %27 : vector<8x128xf32>
      %cst_17 = arith.constant dense<0.000000e+00> : vector<128xf32>
      %29 = vector.multi_reduction <add>, %28, %cst_17 [0] : vector<8x128xf32> to vector<128xf32>
      %30 = vector.shape_cast %29 : vector<128xf32> to vector<1x128xf32>
      %cst_18 = arith.constant 1.250000e-01 : f32
      %31 = vector.broadcast %cst_18 : f32 to vector<1x128xf32>
      %32 = arith.mulf %30, %31 : vector<1x128xf32>
      %cst_19 = arith.constant 1.000000e-03 : f32
      %33 = vector.broadcast %cst_19 : f32 to vector<1x128xf32>
      %34 = arith.addf %32, %33 : vector<1x128xf32>
      %35 = math.rsqrt %34 : vector<1x128xf32>
      %36 = vector.broadcast %35 : vector<1x128xf32> to vector<8x128xf32>
      %37 = arith.mulf %27, %36 : vector<8x128xf32>
      %c0_20 = arith.constant 0 : index
      %c0_21 = arith.constant 0 : index
      %38 = vector.load %arg3[%c0_20, %c0_21] : memref<1x128xf32, #tpu.memory_space<vmem>>, vector<1x128xf32>
      %39 = vector.broadcast %38 : vector<1x128xf32> to vector<8x128xf32>
      %40 = arith.mulf %37, %39 : vector<8x128xf32>
      %c0_22 = arith.constant 0 : index
      %c0_23 = arith.constant 0 : index
      %41 = vector.load %arg4[%c0_22, %c0_23] : memref<1x128xf32, #tpu.memory_space<vmem>>, vector<1x128xf32>
      %42 = vector.broadcast %41 : vector<1x128xf32> to vector<8x128xf32>
      %43 = arith.addf %40, %42 : vector<8x128xf32>
      %cst_24 = arith.constant 0.000000e+00 : f32
      %44 = vector.broadcast %cst_24 : f32 to vector<8x128xf32>
      %45 = arith.maximumf %43, %44 : vector<8x128xf32>
      %46 = arith.truncf %45 : vector<8x128xf32> to vector<8x128xbf16>
      %c0_25 = arith.constant 0 : index
      %c0_26 = arith.constant 0 : index
      %47 = vector.load %arg11[%c0_25, %c0_26] : memref<128x384xbf16, #tpu.memory_space<vmem>>, vector<128x384xbf16>
      %cst_27 = arith.constant dense<0.000000e+00> : vector<8x384xf32>
      %48 = tpu.matmul %46, %47, %cst_27 {dimension_numbers = #tpu.dot_dimension_numbers<[1], [0], [0], [1], [0, 0, 1, 1], [], []>} : vector<8x128xbf16>, vector<128x384xbf16>, vector<8x384xf32> -> vector<8x384xf32>
      %c0_28 = arith.constant 0 : index
      %c0_29 = arith.constant 0 : index
      %49 = vector.load %arg5[%c0_28, %c0_29] : memref<1x384xf32, #tpu.memory_space<vmem>>, vector<1x384xf32>
      %50 = vector.broadcast %49 : vector<1x384xf32> to vector<8x384xf32>
      %51 = arith.addf %48, %50 : vector<8x384xf32>
      %52 = vector.extract_strided_slice %51 {offsets = [0, 0], sizes = [8, 128], strides = [1, 1]} : vector<8x384xf32> to vector<8x128xf32>
      %c0_30 = arith.constant 0 : index
      %c0_31 = arith.constant 0 : index
      %53 = vector.load %arg8[%c0_30, %c0_31] : memref<8x384xf32, #tpu.memory_space<vmem>>, vector<8x128xf32>
      tpu.vector_store %arg8[%c0_30, %c0_31], %52 {strides = array<i32>} : memref<8x384xf32, #tpu.memory_space<vmem>>, vector<8x128xf32>,
      %54 = vector.extract_strided_slice %51 {offsets = [0, 128], sizes = [8, 128], strides = [1, 1]} : vector<8x384xf32> to vector<8x128xf32>
      %cst_32 = arith.constant -5.000000e+01 : f32
      %55 = vector.broadcast %cst_32 : f32 to vector<8x128xf32>
      %56 = arith.maximumf %54, %55 : vector<8x128xf32>
      %cst_33 = arith.constant 5.000000e-01 : f32
      %57 = vector.broadcast %cst_33 : f32 to vector<8x128xf32>
      %58 = arith.mulf %57, %56 : vector<8x128xf32>
      %59 = math.tanh %58 : vector<8x128xf32>
      %cst_34 = arith.constant 5.000000e-01 : f32
      %60 = vector.broadcast %cst_34 : f32 to vector<8x128xf32>
      %61 = arith.mulf %60, %59 : vector<8x128xf32>
      %cst_35 = arith.constant 5.000000e-01 : f32
      %62 = vector.broadcast %cst_35 : f32 to vector<8x128xf32>
      %63 = arith.addf %61, %62 : vector<8x128xf32>
      %c0_36 = arith.constant 0 : index
      %c128 = arith.constant 128 : index
      %64 = vector.load %arg8[%c0_36, %c128] : memref<8x384xf32, #tpu.memory_space<vmem>>, vector<8x128xf32>
      tpu.vector_store %arg8[%c0_36, %c128], %63 {strides = array<i32>} : memref<8x384xf32, #tpu.memory_space<vmem>>, vector<8x128xf32>,
      %65 = vector.extract_strided_slice %51 {offsets = [0, 256], sizes = [8, 128], strides = [1, 1]} : vector<8x384xf32> to vector<8x128xf32>
      %c0_37 = arith.constant 0 : index
      %c256 = arith.constant 256 : index
      %66 = vector.load %arg8[%c0_37, %c256] : memref<8x384xf32, #tpu.memory_space<vmem>>, vector<8x128xf32>
      tpu.vector_store %arg8[%c0_37, %c256], %65 {strides = array<i32>} : memref<8x384xf32, #tpu.memory_space<vmem>>, vector<8x128xf32>,
    } else {
    }
    return
  }
  func.func @transform_0(%arg0: i32) -> (i32, i32) {
    %c0_i32 = arith.constant 0 : i32
    %c0_i32_0 = arith.constant 0 : i32
    return %c0_i32, %arg0 : i32, i32
  }
  func.func @transform_1(%arg0: i32) -> (i32, i32) {
    %c0_i32 = arith.constant 0 : i32
    %c0_i32_0 = arith.constant 0 : i32
    return %arg0, %c0_i32 : i32, i32
  }
  func.func @transform_2(%arg0: i32) -> (i32, i32) {
    %c0_i32 = arith.constant 0 : i32
    %c0_i32_0 = arith.constant 0 : i32
    %c0_i32_1 = arith.constant 0 : i32
    return %c0_i32, %c0_i32_0 : i32, i32
  }
  func.func @transform_3(%arg0: i32) -> (i32, i32) {
    %c0_i32 = arith.constant 0 : i32
    %c0_i32_0 = arith.constant 0 : i32
    %c0_i32_1 = arith.constant 0 : i32
    return %c0_i32, %c0_i32_0 : i32, i32
  }
  func.func @transform_4(%arg0: i32) -> (i32, i32) {
    %c0_i32 = arith.constant 0 : i32
    %c0_i32_0 = arith.constant 0 : i32
    %c0_i32_1 = arith.constant 0 : i32
    return %c0_i32, %c0_i32_0 : i32, i32
  }
  func.func @transform_7(%arg0: i32) -> (i32, i32) {
    %c0_i32 = arith.constant 0 : i32
    %c0_i32_0 = arith.constant 0 : i32
    %c0_i32_1 = arith.constant 0 : i32
    return %c0_i32, %c0_i32_0 : i32, i32
  }
}

</mosaic_0001>

<llo_original>
// kernel: tpu_custom_call.1
$region0: #{tpu_custom_call.1}
  #allocation0 [shape = 'u32[]', space=smem, size = 0x4, offset = 0x4, fixed_abs, tag = 'smem constant byte address 0x4 - core index']
  #allocation1 [shape = 'u32[144,128]{1,0:T(1,128)}', space=vmem, size = 0x12000, scoped, tag = 'internal scratch']
  #allocation2 [shape = 'f32[8,128]{1,0:T(8,128)}', space=vmem, size = 0x1000, scoped, tag = 'scratch operand']
  #allocation3 [shape = 'f32[8,128]{1,0:T(8,128)}', space=vmem, size = 0x1000, scoped, tag = 'scratch operand']
  #allocation4 [shape = 'bf16[128,384]{1,0:T(16,128)(2,1)}', space=vmem, size = 0x18000, scoped, tag = 'scratch operand']
  #allocation5 [shape = 's32[2]{0}', space=sflag, size = 0x8, scoped, tag = 'scratch operand']
  #allocation12 [shape = 's32[]', space=sflag, size = 0x4, offset = 0, fixed_abs, tag = 'sflag constant byte address 0x0 - dummy sync flag']
  #allocation13 [shape = 's32[]', space=sflag, size = 0x4, offset = 0, fixed_abs, tag = 'sflag constant byte address 0x0 - dummy sync flag']
  %s0 = inlined_call_operand.hbm [shape: bf16[8,128], index: 0, kind: input, shape index: {}]
  %s1 = inlined_call_operand.hbm [shape: bf16[128,128], index: 1, kind: input, shape index: {}]
  %s2 = inlined_call_operand.vmem [shape: f32[1,128], index: 2, kind: input, shape index: {}]
  %s3 = inlined_call_operand.vmem [shape: f32[1,128], index: 3, kind: input, shape index: {}]
  %s4 = inlined_call_operand.vmem [shape: f32[1,384], index: 4, kind: input, shape index: {}]
  %s5 = inlined_call_operand.vmem [shape: f32[8,128], index: 5, kind: input, shape index: {}]
  %s6 = inlined_call_operand.hbm [shape: bf16[128,384], index: 6, kind: input, shape index: {}]
  %s7 = inlined_call_operand.hbm [shape: f32[8,384], index: 7, kind: output, shape index: {}]
  %s8 = sld [smem:[#allocation0]]
  $region88: #{tpu_custom_call.1} parent=0
    _
  %s10 = ssub.s32 1, %s8
  %s11 = scalar_select 0, %s10, %s8
  $region1: #{tpu_custom_call.1} parent=0
    #allocation6 [shape = 'u8[2048]{0}', space=vmem, size = 0x800, scoped, tag = 'input window, operand 0, single buffered']
    #allocation7 [shape = 's32[1]{0}', space=sflag, size = 0x4, scoped, tag = 'scoped memory for tpu_custom_call.1']
    #allocation8 [shape = 's32[1]{0}', space=sflag, size = 0x4, scoped, tag = 'scoped memory for tpu_custom_call.1']
    #allocation9 [shape = 'u8[32768]{0}', space=vmem, size = 0x8000, scoped, tag = 'input window, operand 1, single buffered']
    #allocation10 [shape = 's32[1]{0}', space=sflag, size = 0x4, scoped, tag = 'scoped memory for tpu_custom_call.1']
    #allocation11 [shape = 'u8[12288]{0}', space=vmem, size = 0x3000, scoped, tag = 'output window, operand 0, single buffered']
    %12 = vsyncpa [#allocation7], 0
    %13 = vsyncpa [#allocation10], 0
    %14 = vsyncpa [#allocation8], 0
    // Predicated region
    $region2: #{tpu_custom_call.1} parent=1 // pred_check
      _
    $region3: #{tpu_custom_call.1} parent=1 // pred_check_branch
      %16 = sbr.rel (0) target = $region5
    $region4: #{tpu_custom_call.1} parent=1 // pred_region
      %s18 = ssub.s32 64, 64
      %19 = vsyncadd [#allocation7], %s18
      %s21 = sshll.u32 [#allocation6], 4
      %s22 = int_to_ptr.vmem [resolvable:$true] %s21
      %24 = dma.hbm_to_vmem [thread:$0]  %s0, 64, %s22, [#allocation7]
    $region5: #{tpu_custom_call.1} parent=1 // pred_fallthru
      _
    // Predicated region
    $region6: #{tpu_custom_call.1} parent=1 // pred_check
      _
    $region7: #{tpu_custom_call.1} parent=1 // pred_check_branch
      %26 = sbr.rel (0) target = $region9
    $region8: #{tpu_custom_call.1} parent=1 // pred_region
      %s28 = ssub.s32 1024, 1024
      %29 = vsyncadd [#allocation10], %s28
      %s30 = sshll.u32 [#allocation9], 4
      %s31 = int_to_ptr.vmem [resolvable:$true] %s30
      %36 = dma.hbm_to_vmem [thread:$0]  %s1, 1024, %s31, [#allocation10], 64, 64, 4
    $region9: #{tpu_custom_call.1} parent=1 // pred_fallthru
      _
    // Predicated region
    $region10: #{tpu_custom_call.1} parent=1 // pred_check
      _
    $region11: #{tpu_custom_call.1} parent=1 // pred_check_branch
      %38 = sbr.rel (0) target = $region13
    $region12: #{tpu_custom_call.1} parent=1 // pred_region
      _
    $region13: #{tpu_custom_call.1} parent=1 // pred_fallthru
      _
    // Predicated region
    $region14: #{tpu_custom_call.1} parent=1 // pred_check
      _
    $region15: #{tpu_custom_call.1} parent=1 // pred_check_branch
      %40 = sbr.rel (0) target = $region17
    $region16: #{tpu_custom_call.1} parent=1 // pred_region
      _
    $region17: #{tpu_custom_call.1} parent=1 // pred_fallthru
      _
    // Predicated region
    $region18: #{tpu_custom_call.1} parent=1 // pred_check
      _
    $region19: #{tpu_custom_call.1} parent=1 // pred_check_branch
      %42 = sbr.rel (0) target = $region21
    $region20: #{tpu_custom_call.1} parent=1 // pred_region
      _
    $region21: #{tpu_custom_call.1} parent=1 // pred_fallthru
      _
    // Predicated region
    $region22: #{tpu_custom_call.1} parent=1 // pred_check
      _
    $region23: #{tpu_custom_call.1} parent=1 // pred_check_branch
      %44 = sbr.rel (0) target = $region25
    $region24: #{tpu_custom_call.1} parent=1 // pred_region
      %45 = dma.done [#allocation7], 64
    $region25: #{tpu_custom_call.1} parent=1 // pred_fallthru
      _
    // Predicated region
    $region26: #{tpu_custom_call.1} parent=1 // pred_check
      _
    $region27: #{tpu_custom_call.1} parent=1 // pred_check_branch
      %47 = sbr.rel (0) target = $region29
    $region28: #{tpu_custom_call.1} parent=1 // pred_region
      %48 = dma.done [#allocation10], 1024
    $region29: #{tpu_custom_call.1} parent=1 // pred_fallthru
      _
    %p50 = scmp.eq.s32.totalorder 0, 0
    // Predicated region
    $region30: #{tpu_custom_call.1} parent=1 // pred_check
      %p51 = pneg %p50
    $region31: #{tpu_custom_call.1} parent=1 // pred_check_branch
      %53 = sbr.rel (%p51) target = $region33
    $region32: #{tpu_custom_call.1} parent=1 // pred_region
      #allocation14 [shape = 'u32[9]{0}', space=smem, size = 0x24, scoped, tag = 'DMA stride descriptor']
      %p55 = scmp.lt.u32.totalorder 8, 8
      %p56 = pneg %p55
      // Predicated region
      $region34: #{tpu_custom_call.1} parent=32 // pred_check
        _
      $region35: #{tpu_custom_call.1} parent=32 // pred_check_branch
        %58 = sbr.rel (%p55) target = $region37
      $region36: #{tpu_custom_call.1} parent=32 // pred_region
        %s73 = sand.u32 8, 7
        %p74 = scmp.eq.s32.totalorder %s73, 0
        // Predicated region
        $region49: #{tpu_custom_call.1} parent=36 // pred_check
          %p75 = pneg %p74
        $region50: #{tpu_custom_call.1} parent=36 // pred_check_branch
          %77 = sbr.rel (%p75) target = $region52
        $region51: #{tpu_custom_call.1} parent=36 // pred_region
          loop: start=0, step=1, limit=1
          $region53: #{tpu_custom_call.1} parent=51 // loop_pre_header
            _
          $region54: #{tpu_custom_call.1} parent=51 // loop_header
            %s79 = sphi 0, %s83
            %p80 = scmp.ge.s32.totalorder %s79, 1
            %s84 = sphi %s5, %s5
            %s85 = sphi [#allocation3], [#allocation3]
          $region55: #{tpu_custom_call.1} parent=51 // loop_header_branch
            %82 = sbr.rel (%p80) target = $region59
          $region56: #{tpu_custom_call.1} parent=51 // loop_body
            %v86 = vld [vmem:[%s84] sm:$0xff]
            %87 = vst [vmem:[%s85] sm:$0xff] %v86
          $region57: #{tpu_custom_call.1} parent=51 // loop_footer
            %s83 = sadd.s32 1, %s79
          $region58: #{tpu_custom_call.1} parent=51 // loop_footer_branch
            %78 = sbr.rel target = $region54
          $region59: #{tpu_custom_call.1} parent=51 // loop_exit
            _
        $region52: #{tpu_custom_call.1} parent=36 // pred_fallthru
          _
        %p88 = pneg %p74
        // Predicated region
        $region60: #{tpu_custom_call.1} parent=36 // pred_check
          _
        $region61: #{tpu_custom_call.1} parent=36 // pred_check_branch
          %90 = sbr.rel (%p74) target = $region63
        $region62: #{tpu_custom_call.1} parent=36 // pred_region
          %s91 = sand.u32 8, 7
        $region63: #{tpu_custom_call.1} parent=36 // pred_fallthru
          _
      $region37: #{tpu_custom_call.1} parent=32 // pred_fallthru
        _
      // Predicated region
      $region38: #{tpu_custom_call.1} parent=32 // pred_check
        %p59 = pneg %p55
      $region39: #{tpu_custom_call.1} parent=32 // pred_check_branch
        %61 = sbr.rel (%p59) target = $region41
      $region40: #{tpu_custom_call.1} parent=32 // pred_region
        %s62 = sshllo.u32 0, 8
        loop: start=0, step=1, limit=1
        $region42: #{tpu_custom_call.1} parent=40 // loop_pre_header
          _
        $region43: #{tpu_custom_call.1} parent=40 // loop_header
          %s64 = sphi 0, %s68
          %p65 = scmp.ge.s32.totalorder %s64, 1
          %s69 = sphi %s5, %s5
          %s70 = sphi [#allocation3], [#allocation3]
        $region44: #{tpu_custom_call.1} parent=40 // loop_header_branch
          %67 = sbr.rel (%p65) target = $region48
        $region45: #{tpu_custom_call.1} parent=40 // loop_body
          %v71 = vld [vmem:[%s69] sm:%s62]
          %72 = vst [vmem:[%s70] sm:%s62] %v71
        $region46: #{tpu_custom_call.1} parent=40 // loop_footer
          %s68 = sadd.s32 1, %s64
        $region47: #{tpu_custom_call.1} parent=40 // loop_footer_branch
          %63 = sbr.rel target = $region43
        $region48: #{tpu_custom_call.1} parent=40 // loop_exit
          _
      $region41: #{tpu_custom_call.1} parent=32 // pred_fallthru
        _
      // Predicated region
      $region64: #{tpu_custom_call.1} parent=32 // pred_check
        _
      $region65: #{tpu_custom_call.1} parent=32 // pred_check_branch
        %94 = sbr.rel (0) target = $region67
      $region66: #{tpu_custom_call.1} parent=32 // pred_region
        %95 = vsyncadd [#allocation5], 128
      $region67: #{tpu_custom_call.1} parent=32 // pred_fallthru
        _
      %s96 = scalar_lea.sflag [#allocation5], 1
      %s98 = sshll.u32 1, 14
      %s99 = sxor.u32 4294967295, %s98
      %s101 = sld [smem:[#allocation0]]
      %s102 = sadd.s32 2, %s101
      %s104 = sshll.u32 7, 26
      %s105 = sxor.u32 4294967295, %s104
      %s106 = sand.u32 0, %s105
      %s107 = sshll.u32 %s102, 26
      %s108 = sor.u32 %s106, %s107
      %s109 = sshll.u32 [#allocation4], 4
      %s110 = int_to_ptr.vmem [resolvable:$true] %s109
      %113 = sst [smem:[#allocation14]] 384
      %s114 = scalar_lea.smem [#allocation14], 1
      %115 = sst [smem:[%s114]] 384
      %s116 = scalar_lea.smem [#allocation14], 2
      %117 = sst [smem:[%s116]] 3
      %s118 = scalar_lea.smem [#allocation14], 3
      %119 = sst [smem:[%s118]] 64
      %s120 = scalar_lea.smem [#allocation14], 4
      %121 = sst [smem:[%s120]] 128
      %s122 = scalar_lea.smem [#allocation14], 5
      %123 = sst [smem:[%s122]] 2
      %s124 = scalar_lea.smem [#allocation14], 6
      %125 = sst [smem:[%s124]] 192
      %s126 = scalar_lea.smem [#allocation14], 7
      %127 = sst [smem:[%s126]] 64
      %s128 = scalar_lea.smem [#allocation14], 8
      %129 = sst [smem:[%s128]] 4
      %131 = dma.general %s6, 3072, %s110, %s96, [#allocation13], [#allocation14], %s108, 0
    $region33: #{tpu_custom_call.1} parent=1 // pred_fallthru
      _
    %v132 = vld [vmem:[#allocation6] sm:$0xf]
    %v133 = vld [vmem:[#allocation9] sm:$0xf]
    %v134 = vld [vmem:[#allocation9 + $0x4] sm:$0xf]
    %v135 = vld [vmem:[#allocation9 + $0x8] sm:$0xf]
    %v136 = vld [vmem:[#allocation9 + $0xc] sm:$0xf]
    %v137 = vld [vmem:[#allocation9 + $0x10] sm:$0xf]
    %v138 = vld [vmem:[#allocation9 + $0x14] sm:$0xf]
    %v139 = vld [vmem:[#allocation9 + $0x18] sm:$0xf]
    %v140 = vld [vmem:[#allocation9 + $0x1c] sm:$0xf]
    %v141 = vld [vmem:[#allocation9 + $0x20] sm:$0xf]
    %v142 = vld [vmem:[#allocation9 + $0x24] sm:$0xf]
    %v143 = vld [vmem:[#allocation9 + $0x28] sm:$0xf]
    %v144 = vld [vmem:[#allocation9 + $0x2c] sm:$0xf]
    %v145 = vld [vmem:[#allocation9 + $0x30] sm:$0xf]
    %v146 = vld [vmem:[#allocation9 + $0x34] sm:$0xf]
    %v147 = vld [vmem:[#allocation9 + $0x38] sm:$0xf]
    %v148 = vld [vmem:[#allocation9 + $0x3c] sm:$0xf]
    %v165 = vunpack.c.l.b16 %v133
    %v166 = vunpack.c.l.b16 %v134
    %v167 = vunpack.c.l.b16 %v135
    %v168 = vunpack.c.l.b16 %v136
    %v169 = vunpack.c.l.b16 %v137
    %v170 = vunpack.c.l.b16 %v138
    %v171 = vunpack.c.l.b16 %v139
    %v172 = vunpack.c.l.b16 %v140
    %v173 = vunpack.c.l.b16 %v141
    %v174 = vunpack.c.l.b16 %v142
    %v175 = vunpack.c.l.b16 %v143
    %v176 = vunpack.c.l.b16 %v144
    %v177 = vunpack.c.l.b16 %v145
    %v178 = vunpack.c.l.b16 %v146
    %v179 = vunpack.c.l.b16 %v147
    %v180 = vunpack.c.l.b16 %v148
    %v181 = vpack.c.b16 %v166, %v165
    %v182 = vpack.c.b16 %v168, %v167
    %v183 = vpack.c.b16 %v170, %v169
    %v184 = vpack.c.b16 %v172, %v171
    %v185 = vpack.c.b16 %v174, %v173
    %v186 = vpack.c.b16 %v176, %v175
    %v187 = vpack.c.b16 %v178, %v177
    %v188 = vpack.c.b16 %v180, %v179
    %197 = vmatprep.subr.bf16.mxu0 0
    %198 = vmatpush1.bf16.msra.mxu0 %v181
    %199 = vmatprep.subr.bf16.mxu0 0
    %200 = vmatpush1.bf16.msra.mxu0 %v182
    %201 = vmatprep.subr.bf16.mxu0 0
    %202 = vmatpush1.bf16.msra.mxu0 %v183
    %203 = vmatprep.subr.bf16.mxu0 0
    %204 = vmatpush1.bf16.msra.mxu0 %v184
    %205 = vmatprep.subr.bf16.mxu0 0
    %206 = vmatpush1.bf16.msra.mxu0 %v185
    %207 = vmatprep.subr.bf16.mxu0 0
    %208 = vmatpush1.bf16.msra.mxu0 %v186
    %209 = vmatprep.subr.bf16.mxu0 0
    %210 = vmatpush1.bf16.msra.mxu0 %v187
    %211 = vmatprep.subr.bf16.mxu0 0
    %212 = vmatpush1.bf16.msra.mxu0 %v188
    %213 = vmatprep.subr.bf16.mxu0 0
    %214 = vmatpush1.bf16.msra.mxu0 0
    %215 = vmatprep.subr.bf16.mxu0 0
    %216 = vmatpush1.bf16.msra.mxu0 0
    %217 = vmatprep.subr.bf16.mxu0 0
    %218 = vmatpush1.bf16.msra.mxu0 0
    %219 = vmatprep.subr.bf16.mxu0 0
    %220 = vmatpush1.bf16.msra.mxu0 0
    %221 = vmatprep.subr.bf16.mxu0 0
    %222 = vmatpush1.bf16.msra.mxu0 0
    %223 = vmatprep.subr.bf16.mxu0 0
    %224 = vmatpush1.bf16.msra.mxu0 0
    %225 = vmatprep.subr.bf16.mxu0 0
    %226 = vmatpush1.bf16.msra.mxu0 0
    %227 = vmatprep.subr.bf16.mxu0 0
    %228 = vmatpush1.bf16.msra.mxu0 0
    %229 = vmatprep.mubr.bf16.mxu0 0
    %230 = vmatmul.mubr.bf16.gmra.mrb[0].mxu0 %v132
    %v231 = vpop.f32.mrb[0].mxu0
    %v232 = vadd.f32 0.0, %v231
    %v233 = vpop.f32.mrb[0].mxu0
    %v234 = vpop.f32.mrb[0].mxu0
    %v235 = vpop.f32.mrb[0].mxu0
    %236 = vdwg.mxu0
    // Predicated region
    $region68: #{tpu_custom_call.1} parent=1 // pred_check
      %p237 = pneg %p50
    $region69: #{tpu_custom_call.1} parent=1 // pred_check_branch
      %239 = sbr.rel (%p237) target = $region71
    $region70: #{tpu_custom_call.1} parent=1 // pred_region
      %240 = vst [vmem:[#allocation2] sm:$0xff] %v232
    $region71: #{tpu_custom_call.1} parent=1 // pred_fallthru
      _
    %p241 = scmp.gt.s32.totalorder 0, 0
    // Predicated region
    $region72: #{tpu_custom_call.1} parent=1 // pred_check
      %p242 = pneg %p241
    $region73: #{tpu_custom_call.1} parent=1 // pred_check_branch
      %244 = sbr.rel (%p242) target = $region75
    $region74: #{tpu_custom_call.1} parent=1 // pred_region
      %v245 = vld [vmem:[#allocation2] sm:$0xff]
      %v246 = vadd.f32 %v245, %v232
      %247 = vst [vmem:[#allocation2] sm:$0xff] %v246
    $region75: #{tpu_custom_call.1} parent=1 // pred_fallthru
      _
    // Predicated region
    $region76: #{tpu_custom_call.1} parent=1 // pred_check
      %p248 = pneg %p50
    $region77: #{tpu_custom_call.1} parent=1 // pred_check_branch
      %250 = sbr.rel (%p248) target = $region79
    $region78: #{tpu_custom_call.1} parent=1 // pred_region
      %s251 = smul.u32 8, 1
      %s252 = sshll.u32 %s251, 4
      %253 = dma.done [#allocation5], %s252
      %s254 = scalar_lea.sflag [#allocation5], 1
      %s255 = smul.u32 4, 16
      %s256 = smul.u32 %s255, 3
      %s257 = sshll.u32 %s256, 4
      %258 = dma.done %s254, %s257
      %v259 = vld [vmem:[#allocation2] sm:$0xff]
      %v260 = vld [vmem:[#allocation3] sm:$0xff]
      %v261 = vadd.f32 %v259, %v260
      %v262 = vrot.slane %v261, 4
      %v263 = vadd.f32 %v261, %v262
      %v264 = vrot.slane %v263, 2
      %v265 = vadd.f32 %v263, %v264
      %v266 = vrot.slane %v265, 1
      %v267 = vadd.f32 %v265, %v266
      %v268 = vmul.f32 %v267, 0.125
      %v269 = vsub.f32 %v261, %v268
      %v270 = vmul.f32 %v269, %v269
      %v271 = vrot.slane %v270, 4
      %v272 = vadd.f32 %v270, %v271
      %v273 = vrot.slane %v272, 2
      %v274 = vadd.f32 %v272, %v273
      %v275 = vrot.slane %v274, 1
      %v276 = vadd.f32 %v274, %v275
      %v277 = vmul.f32 %v276, 0.125
      %v278 = vadd.f32 %v277, 0.001
      %v279 = vrsqrt.pop %v278
      %v280 = vmul.f32 %v269, %v279
      %v281 = vld [vmem:[%s2] sm:$0x1]
      %v283 = vlaneseq
      %v284 = vshrl.u32 %v283, 7
      %v285 = vsub.s32 0, %v284
      %v286 = vrot.slane %v281, %v285
      %v288 = vmul.f32 %v280, %v286
      %v289 = vld [vmem:[%s3] sm:$0x1]
      %v291 = vlaneseq
      %v292 = vshrl.u32 %v291, 7
      %v293 = vsub.s32 0, %v292
      %v294 = vrot.slane %v289, %v293
      %v296 = vadd.f32 %v288, %v294
      %v297 = vmax.f32 %v296, 0.0
      %v298 = vpack.c.bf16 %v297, %v297
      %v299 = vld [vmem:[#allocation4] sm:$0xff]
      %v300 = vld [vmem:[#allocation4 + $0x8] sm:$0xff]
      %v301 = vld [vmem:[#allocation4 + $0x10] sm:$0xff]
      %v302 = vld [vmem:[#allocation4 + $0x18] sm:$0xff]
      %v303 = vld [vmem:[#allocation4 + $0x20] sm:$0xff]
      %v304 = vld [vmem:[#allocation4 + $0x28] sm:$0xff]
      %v305 = vld [vmem:[#allocation4 + $0x30] sm:$0xff]
      %v306 = vld [vmem:[#allocation4 + $0x38] sm:$0xff]
      %v307 = vld [vmem:[#allocation4 + $0x40] sm:$0xff]
      %v308 = vld [vmem:[#allocation4 + $0x48] sm:$0xff]
      %v309 = vld [vmem:[#allocation4 + $0x50] sm:$0xff]
      %v310 = vld [vmem:[#allocation4 + $0x58] sm:$0xff]
      %v311 = vld [vmem:[#allocation4 + $0x60] sm:$0xff]
      %v312 = vld [vmem:[#allocation4 + $0x68] sm:$0xff]
      %v313 = vld [vmem:[#allocation4 + $0x70] sm:$0xff]
      %v314 = vld [vmem:[#allocation4 + $0x78] sm:$0xff]
      %v315 = vld [vmem:[#allocation4 + $0x80] sm:$0xff]
      %v316 = vld [vmem:[#allocation4 + $0x88] sm:$0xff]
      %v317 = vld [vmem:[#allocation4 + $0x90] sm:$0xff]
      %v318 = vld [vmem:[#allocation4 + $0x98] sm:$0xff]
      %v319 = vld [vmem:[#allocation4 + $0xa0] sm:$0xff]
      %v320 = vld [vmem:[#allocation4 + $0xa8] sm:$0xff]
      %v321 = vld [vmem:[#allocation4 + $0xb0] sm:$0xff]
      %v322 = vld [vmem:[#allocation4 + $0xb8] sm:$0xff]
      %v323 = vld [vmem:[%s4] sm:$0x7]
      %v325 = vlaneseq
      %v326 = vshrl.u32 %v325, 7
      %v327 = vsub.s32 0, %v326
      %v328 = vrot.slane %v323, %v327
      %v329 = vlaneseq
      %v330 = vshrl.u32 %v329, 7
      %v331 = vsub.s32 1, %v330
      %v332 = vrot.slane %v323, %v331
      %v333 = vlaneseq
      %v334 = vshrl.u32 %v333, 7
      %v335 = vsub.s32 2, %v334
      %v336 = vrot.slane %v323, %v335
      %340 = vmatprep.subr.bf16.mxu0 %v300
      %341 = vmatpush1.bf16.msra.mxu0 %v299
      %342 = vmatprep.subr.bf16.mxu0 %v303
      %343 = vmatpush1.bf16.msra.mxu0 %v302
      %344 = vmatprep.subr.bf16.mxu0 %v306
      %345 = vmatpush1.bf16.msra.mxu0 %v305
      %346 = vmatprep.subr.bf16.mxu0 %v309
      %347 = vmatpush1.bf16.msra.mxu0 %v308
      %348 = vmatprep.subr.bf16.mxu0 %v312
      %349 = vmatpush1.bf16.msra.mxu0 %v311
      %350 = vmatprep.subr.bf16.mxu0 %v315
      %351 = vmatpush1.bf16.msra.mxu0 %v314
      %352 = vmatprep.subr.bf16.mxu0 %v318
      %353 = vmatpush1.bf16.msra.mxu0 %v317
      %354 = vmatprep.subr.bf16.mxu0 %v321
      %355 = vmatpush1.bf16.msra.mxu0 %v320
      %356 = vmatprep.subr.bf16.mxu0 0
      %357 = vmatpush1.bf16.msra.mxu0 0
      %358 = vmatprep.subr.bf16.mxu0 0
      %359 = vmatpush1.bf16.msra.mxu0 0
      %360 = vmatprep.subr.bf16.mxu0 0
      %361 = vmatpush1.bf16.msra.mxu0 0
      %362 = vmatprep.subr.bf16.mxu0 0
      %363 = vmatpush1.bf16.msra.mxu0 0
      %364 = vmatprep.subr.bf16.mxu0 0
      %365 = vmatpush1.bf16.msra.mxu0 0
      %366 = vmatprep.subr.bf16.mxu0 0
      %367 = vmatpush1.bf16.msra.mxu0 0
      %368 = vmatprep.subr.bf16.mxu0 0
      %369 = vmatpush1.bf16.msra.mxu0 0
      %370 = vmatprep.subr.bf16.mxu0 0
      %371 = vmatpush1.bf16.msra.mxu0 0
      %372 = vmatprep.mubr.bf16.mxu0 0
      %373 = vmatmul.mubr.bf16.gmra.mrb[0].mxu0 %v298
      %v374 = vpop.f32.mrb[0].mxu0
      %v375 = vadd.f32 %v328, %v374
      %v376 = vpop.f32.mrb[0].mxu0
      %v377 = vadd.f32 %v332, %v376
      %v378 = vpop.f32.mrb[0].mxu0
      %v379 = vpop.f32.mrb[0].mxu0
      %380 = vdwg.mxu0
      %381 = vmatprep.subr.bf16.mxu0 0
      %382 = vmatpush1.bf16.msra.mxu0 %v301
      %383 = vmatprep.subr.bf16.mxu0 0
      %384 = vmatpush1.bf16.msra.mxu0 %v304
      %385 = vmatprep.subr.bf16.mxu0 0
      %386 = vmatpush1.bf16.msra.mxu0 %v307
      %387 = vmatprep.subr.bf16.mxu0 0
      %388 = vmatpush1.bf16.msra.mxu0 %v310
      %389 = vmatprep.subr.bf16.mxu0 0
      %390 = vmatpush1.bf16.msra.mxu0 %v313
      %391 = vmatprep.subr.bf16.mxu0 0
      %392 = vmatpush1.bf16.msra.mxu0 %v316
      %393 = vmatprep.subr.bf16.mxu0 0
      %394 = vmatpush1.bf16.msra.mxu0 %v319
      %395 = vmatprep.subr.bf16.mxu0 0
      %396 = vmatpush1.bf16.msra.mxu0 %v322
      %397 = vmatprep.subr.bf16.mxu0 0
      %398 = vmatpush1.bf16.msra.mxu0 0
      %399 = vmatprep.subr.bf16.mxu0 0
      %400 = vmatpush1.bf16.msra.mxu0 0
      %401 = vmatprep.subr.bf16.mxu0 0
      %402 = vmatpush1.bf16.msra.mxu0 0
      %403 = vmatprep.subr.bf16.mxu0 0
      %404 = vmatpush1.bf16.msra.mxu0 0
      %405 = vmatprep.subr.bf16.mxu0 0
      %406 = vmatpush1.bf16.msra.mxu0 0
      %407 = vmatprep.subr.bf16.mxu0 0
      %408 = vmatpush1.bf16.msra.mxu0 0
      %409 = vmatprep.subr.bf16.mxu0 0
      %410 = vmatpush1.bf16.msra.mxu0 0
      %411 = vmatprep.subr.bf16.mxu0 0
      %412 = vmatpush1.bf16.msra.mxu0 0
      %413 = vmatprep.mubr.bf16.mxu0 0
      %414 = vmatmul.mubr.bf16.gmra.mrb[0].mxu0 %v298
      %v415 = vpop.f32.mrb[0].mxu0
      %v416 = vadd.f32 %v336, %v415
      %v417 = vpop.f32.mrb[0].mxu0
      %v418 = vpop.f32.mrb[0].mxu0
      %v419 = vpop.f32.mrb[0].mxu0
      %420 = vdwg.mxu0
      %421 = vst [vmem:[#allocation11] sm:$0xff] %v375
      %v422 = vmax.f32 %v377, -50.0
      %v423 = vmul.f32 %v422, 0.5
      %v424 = vtanh.pop %v423
      %v425 = vmul.f32 %v424, 0.5
      %v426 = vadd.f32 %v425, 0.5
      %427 = vst [vmem:[#allocation11 + $0x8] sm:$0xff] %v426
      %428 = vst [vmem:[#allocation11 + $0x10] sm:$0xff] %v416
    $region79: #{tpu_custom_call.1} parent=1 // pred_fallthru
      _
    // Predicated region
    $region80: #{tpu_custom_call.1} parent=1 // pred_check
      _
    $region81: #{tpu_custom_call.1} parent=1 // pred_check_branch
      %430 = sbr.rel (0) target = $region83
    $region82: #{tpu_custom_call.1} parent=1 // pred_region
      %s432 = ssub.s32 384, 384
      %433 = vsyncadd [#allocation8], %s432
      %s435 = sshll.u32 [#allocation11], 4
      %s436 = int_to_ptr.vmem [resolvable:$true] %s435
      %438 = dma.vmem_to_hbm [thread:$0]  %s436, 384, %s7, [#allocation8]
    $region83: #{tpu_custom_call.1} parent=1 // pred_fallthru
      _
    // Predicated region
    $region84: #{tpu_custom_call.1} parent=1 // pred_check
      _
    $region85: #{tpu_custom_call.1} parent=1 // pred_check_branch
      %440 = sbr.rel (0) target = $region87
    $region86: #{tpu_custom_call.1} parent=1 // pred_region
      %441 = dma.done [#allocation8], 384
    $region87: #{tpu_custom_call.1} parent=1 // pred_fallthru
      _
    %442 = vsyncpa [#allocation7], 1
    %443 = vsyncpa [#allocation10], 1
    %444 = vsyncpa [#allocation8], 1
  %445 = vsyncmov [#allocation5]
  %s446 = vpop.sfrf %445
  %p447 = scmp.eq.s32.totalorder %s446, 0
  %p448 = pneg %p447
  %450 = shalt.err (%p448)
  %s451 = scalar_lea.sflag [#allocation5], 1
  %452 = vsyncmov %s451
  %s453 = vpop.sfrf %452
  %p454 = scmp.eq.s32.totalorder %s453, 0
  %p455 = pneg %p454
  %457 = shalt.err (%p455)

</llo_original>
